<compile_context>
chip_gen: v7x
topology: tpu7x:2x2x1
jax: 0.10.0
libtpu: 0.0.40
codegen_flags: <defaults>
</compile_context>

<pallas_src>
from functools import partial

import jax
import jax.numpy as jnp
from jax.experimental import pallas as pl
from jax.experimental.pallas import tpu as pltpu


def _pick_tile(n, pref):
    """Largest convenient tile: `pref` if it divides n, else the full extent."""
    return pref if (n >= pref and n % pref == 0) else n


# --------------------------------------------------------------------------
# Stage 1: linear transform + fused per-head attention scores
# --------------------------------------------------------------------------
def _gat_linear_kernel(x_ref, w_ref, wa_ref, h_ref, s_ref):
    # h = Theta * x ; s = x @ (Theta A) gives [a_i . h | a_j . h] for every head
    x = x_ref[...]
    h_ref[...] = jnp.dot(x, w_ref[...], preferred_element_type=jnp.float32)
    s_ref[...] = jnp.dot(x, wa_ref[...], preferred_element_type=jnp.float32)


# --------------------------------------------------------------------------
# Stage 2: masked segment softmax (online) + weighted aggregation
# --------------------------------------------------------------------------
def _gat_attn_kernel(s_i_ref, s_jt_ref, h_ref, adj_ref, bias_ref, out_ref,
                     m_ref, l_ref, acc_ref,
                     *, heads, out_channels, negative_slope):
    k = pl.program_id(1)

    @pl.when(k == 0)
    def _init():
        m_ref[...] = jnp.full(m_ref.shape, -1e30, jnp.float32)
        l_ref[...] = jnp.zeros(l_ref.shape, jnp.float32)
        acc_ref[...] = jnp.zeros(acc_ref.shape, jnp.float32)

    adj = adj_ref[...].astype(jnp.float32)          # int8 mask in HBM, f32 in vregs
    mask = adj > 0.0                                # [TM, TN]
    s_i = s_i_ref[...]                              # [TM, H]  target-side scores
    h_src = h_ref[...]                              # [TN, H*C] source features
    neg_big = jnp.float32(-1e30)
    ns = jnp.float32(negative_slope)

    # read running state once (full-width loads), write once per step below
    m_old_all = m_ref[...]                          # [TM, H]
    l_old_all = l_ref[...]                          # [TM, H]
    acc_old_all = acc_ref[...]                      # [TM, H*C]

    m_new_parts, l_new_parts, acc_new_parts = [], [], []

    # heads is small & static; per-head intermediates are only [TM, TN]
    for hd in range(heads):
        lo = hd * out_channels
        hi = lo + out_channels

        # logits[i, j] = a_i . (Theta x_i) + a_j . (Theta x_j); LeakyReLU; mask
        logits = s_i[:, hd:hd + 1] + s_jt_ref[hd:hd + 1, :]          # [TM, TN]
        logits = jnp.where(logits >= 0, logits, ns * logits)
        logits = jnp.where(mask, logits, neg_big)

        # online softmax update
        m_old = m_old_all[:, hd:hd + 1]                               # [TM, 1]
        m_new = jnp.maximum(m_old, jnp.max(logits, axis=1, keepdims=True))
        corr = jnp.exp(m_old - m_new)                                 # [TM, 1]
        e = jnp.where(mask, jnp.exp(logits - m_new), 0.0)             # [TM, TN]

        l_new_parts.append(corr * l_old_all[:, hd:hd + 1]
                           + jnp.sum(e, axis=1, keepdims=True))
        acc_new_parts.append(corr * acc_old_all[:, lo:hi] + jnp.dot(
            e, h_src[:, lo:hi], preferred_element_type=jnp.float32))
        m_new_parts.append(m_new)

    # single full-width store per state array per grid step
    m_ref[...] = (m_new_parts[0] if heads == 1
                  else jnp.concatenate(m_new_parts, axis=1))
    l_ref[...] = (l_new_parts[0] if heads == 1
                  else jnp.concatenate(l_new_parts, axis=1))
    acc_ref[...] = (acc_new_parts[0] if heads == 1
                    else jnp.concatenate(acc_new_parts, axis=1))

    @pl.when(k == pl.num_programs(1) - 1)
    def _finalize():
        # fold normalization into the [TM, C] accumulators (no [N, N] divide)
        inv_l = pl.reciprocal(l_ref[...] + jnp.float32(1e-16))        # [TM, H]
        acc = acc_ref[...]
        parts = [acc[:, hd * out_channels:(hd + 1) * out_channels]
                 * inv_l[:, hd:hd + 1] for hd in range(heads)]
        out = parts[0] if heads == 1 else jnp.concatenate(parts, axis=1)
        # single lane-dense [TM, H*C] store; bias added once here
        out_ref[...] = out + bias_ref[...]


# --------------------------------------------------------------------------
# Wrapper
# --------------------------------------------------------------------------
def gat_conv(x, edge_index, weight, att, bias, *, heads, out_channels,
             negative_slope=0.2, tile_m=128, tile_n=128):
    """GATConv forward (concat=True, dropout=0, 'add' aggregation)."""
    N, f_in = x.shape
    hc = heads * out_channels

    # dense int8 adjacency mask, self loops included (matches add_self_loops);
    # target = edge_index[0], source = edge_index[1] (MessagePassing.propagate)
    adj = jnp.zeros((N, N), jnp.int8)
    adj = adj.at[edge_index[0], edge_index[1]].set(1)
    adj = adj.at[jnp.arange(N), jnp.arange(N)].set(1)

    # block-diagonal fused attention matrix A: [H*C, 2H]
    # column hd        -> a_i vector of head hd
    # column heads+hd  -> a_j vector of head hd
    att2 = att.reshape(heads, 2 * out_channels).astype(jnp.float32)
    a_mat = jnp.zeros((hc, 2 * heads), jnp.float32)
    for hd in range(heads):
        lo, hi = hd * out_channels, (hd + 1) * out_channels
        a_mat = a_mat.at[lo:hi, hd].set(att2[hd, :out_channels])
        a_mat = a_mat.at[lo:hi, heads + hd].set(att2[hd, out_channels:])

    x = x.astype(jnp.float32)
    weight = weight.astype(jnp.float32)
    # fuse the score matvecs into the weight: s = (xW)A = x(WA)
    wa = weight @ a_mat                                # [f_in, 2H], tiny
    bias2 = bias.reshape(1, hc).astype(jnp.float32)

    tm = _pick_tile(N, tile_m)
    tn = _pick_tile(N, tile_n)

    # ---- stage 1: h = xW, s = x(WA) ----------------------------------------
    h, s = pl.pallas_call(
        _gat_linear_kernel,
        out_shape=(jax.ShapeDtypeStruct((N, hc), jnp.float32),
                   jax.ShapeDtypeStruct((N, 2 * heads), jnp.float32)),
        grid_spec=pltpu.PrefetchScalarGridSpec(
            num_scalar_prefetch=0,
            grid=(N // tm,),
            in_specs=[pl.BlockSpec((tm, f_in), lambda i: (i, 0)),
                      pl.BlockSpec((f_in, hc), lambda i: (0, 0)),
                      pl.BlockSpec((f_in, 2 * heads), lambda i: (0, 0))],
            out_specs=[pl.BlockSpec((tm, hc), lambda i: (i, 0)),
                       pl.BlockSpec((tm, 2 * heads), lambda i: (i, 0))]),
        compiler_params=pltpu.CompilerParams(
            dimension_semantics=("parallel",)),
    )(x, weight, wa)

    s_i = s[:, :heads]                 # [N, H]  target-side scores
    s_jt = s[:, heads:].T              # [H, N]  source-side scores, lane-major

    kernel = partial(_gat_attn_kernel, heads=heads, out_channels=out_channels,
                     negative_slope=negative_slope)

    # ---- stage 2: masked softmax + aggregation -----------------------------
    out = pl.pallas_call(
        kernel,
        out_shape=jax.ShapeDtypeStruct((N, hc), jnp.float32),
        grid_spec=pltpu.PrefetchScalarGridSpec(
            num_scalar_prefetch=0,
            grid=(N // tm, N // tn),
            in_specs=[
                pl.BlockSpec((tm, heads), lambda i, k: (i, 0)),   # s_i row tile
                pl.BlockSpec((heads, tn), lambda i, k: (0, k)),   # s_j col tile
                pl.BlockSpec((tn, hc), lambda i, k: (k, 0)),      # source features
                pl.BlockSpec((tm, tn), lambda i, k: (i, k)),      # int8 adjacency tile
                pl.BlockSpec((1, hc), lambda i, k: (0, 0)),       # bias
            ],
            out_specs=pl.BlockSpec((tm, hc), lambda i, k: (i, 0)),
            scratch_shapes=[pltpu.VMEM((tm, heads), jnp.float32),   # running max
                            pltpu.VMEM((tm, heads), jnp.float32),   # running sum
                            pltpu.VMEM((tm, hc), jnp.float32)]),    # accumulator
        compiler_params=pltpu.CompilerParams(
            dimension_semantics=("parallel", "arbitrary"),
            vmem_limit_bytes=32 * 1024 * 1024),
    )(s_i, s_jt, h, adj, bias2)
    return out


# --------------------------------------------------------------------------
# Pure-JAX edge-list reference mirroring the PyTorch module
# --------------------------------------------------------------------------
def gat_conv_reference(x, edge_index, weight, att, bias, *, heads, out_channels,
                       negative_slope=0.2):
    N = x.shape[0]
    loops = jnp.stack([jnp.arange(N), jnp.arange(N)])
    ei = jnp.concatenate([edge_index, loops], axis=1)
    h = (x @ weight).reshape(N, heads, out_channels)
    x_i = h[ei[0]]
    x_j = h[ei[1]]
    alpha = (jnp.concatenate([x_i, x_j], axis=-1) * att).sum(-1)      # [E, H]
    alpha = jnp.where(alpha >= 0, alpha, negative_slope * alpha)
    amax = jax.ops.segment_max(alpha, ei[0], num_segments=N)[ei[0]]
    ex = jnp.exp(alpha - amax)
    denom = jax.ops.segment_sum(ex, ei[0], num_segments=N)[ei[0]] + 1e-16
    alpha = ex / denom
    msg = x_j * alpha[:, :, None]
    out = jax.ops.segment_sum(msg, ei[0], num_segments=N)             # [N, H, C]
    return out.reshape(N, heads * out_channels) + bias


def glorot(key, shape):
    fan_in, fan_out = shape[-2], shape[-1]
    lim = (6.0 / (fan_in + fan_out)) ** 0.5
    return jax.random.uniform(key, shape, jnp.float32, minval=-lim, maxval=lim)


if __name__ == "__main__":
    key = jax.random.PRNGKey(0)

    def run_case(subkey, N, in_ch, out_ch, heads, edge_index):
        kx, kw, ka = jax.random.split(subkey, 3)
        x = jax.random.normal(kx, (N, in_ch), jnp.float32)
        weight = glorot(kw, (in_ch, heads * out_ch))
        att = glorot(ka, (1, heads, 2 * out_ch))
        bias = jnp.zeros((heads * out_ch,), jnp.float32)   # zeros() init, concat=True

        out = gat_conv(x, edge_index, weight, att, bias,
                       heads=heads, out_channels=out_ch, negative_slope=0.2)
        out = jax.block_until_ready(out)
        ref = gat_conv_reference(x, edge_index, weight, att, bias,
                                 heads=heads, out_channels=out_ch,
                                 negative_slope=0.2)
        assert out.shape == (N, heads * out_ch)
        err = jnp.max(jnp.abs(out - ref))
        assert jnp.allclose(out, ref, atol=2e-4, rtol=2e-4), f"max abs err {err}"
        return out

    k1, k2 = jax.random.split(key)

    # Case 1: tiny graph, single grid step (N smaller than the tile sizes).
    N1 = 8
    targets = jnp.array([0, 1, 2, 3, 4, 5, 6, 7, 0, 1, 2, 3], jnp.int32)
    sources = jnp.array([1, 2, 3, 4, 5, 6, 7, 0, 2, 3, 4, 5], jnp.int32)
    ei1 = jnp.stack([targets, sources])
    run_case(k1, N1, 32, 16, 2, ei1)

    # Case 2: exercises the (parallel row-tile x arbitrary col-tile) grid and the
    # online softmax across multiple source tiles (grid = (2, 2) with 128-tiles).
    N2 = 256
    offs = jnp.array([1, 3, 7, 19], jnp.int32)
    tgt2 = jnp.repeat(jnp.arange(N2, dtype=jnp.int32), offs.shape[0])
    src2 = (tgt2 + jnp.tile(offs, N2)) % N2
    ei2 = jnp.stack([tgt2, src2])
    run_case(k2, N2, 64, 16, 2, ei2)

    print("KERNEL_OK")
</pallas_src>

<mosaic_0001>
module attributes {stable_mosaic.version = 11 : i64} {
  func.func @_gat_linear_kernel(%arg0: i32, %arg1: memref<8x32xf32, #tpu.memory_space<vmem>>, %arg2: memref<32x32xf32, #tpu.memory_space<vmem>>, %arg3: memref<32x4xf32, #tpu.memory_space<vmem>>, %arg4: memref<8x32xf32, #tpu.memory_space<vmem>>, %arg5: memref<8x4xf32, #tpu.memory_space<vmem>>) attributes {dimension_semantics = [#tpu.dimension_semantics<parallel>], iteration_bounds = array<i64: 1>, scalar_prefetch = 0 : i64, scratch_operands = 0 : i64, tpu.core_type = #tpu.core_type<tc>, window_params = [{transform_indices = @transform_0, window_bounds = array<i64: 8, 32>}, {pipeline_mode = #tpu.pipeline_mode<synchronous>, transform_indices = @transform_1, window_bounds = array<i64: 32, 32>}, {pipeline_mode = #tpu.pipeline_mode<synchronous>, transform_indices = @transform_2, window_bounds = array<i64: 32, 4>}, {transform_indices = @transform_3, window_bounds = array<i64: 8, 32>}, {transform_indices = @transform_4, window_bounds = array<i64: 8, 4>}]} {
    %c0 = arith.constant 0 : index
    %c0_0 = arith.constant 0 : index
    %0 = vector.load %arg1[%c0, %c0_0] : memref<8x32xf32, #tpu.memory_space<vmem>>, vector<8x32xf32>
    %c0_1 = arith.constant 0 : index
    %c0_2 = arith.constant 0 : index
    %1 = vector.load %arg2[%c0_1, %c0_2] : memref<32x32xf32, #tpu.memory_space<vmem>>, vector<32x32xf32>
    %cst = arith.constant dense<0.000000e+00> : vector<8x32xf32>
    %2 = tpu.matmul %0, %1, %cst {dimension_numbers = #tpu.dot_dimension_numbers<[1], [0], [0], [1], [0, 0, 1, 1], [], []>} : vector<8x32xf32>, vector<32x32xf32>, vector<8x32xf32> -> vector<8x32xf32>
    %c0_3 = arith.constant 0 : index
    %c0_4 = arith.constant 0 : index
    %3 = vector.load %arg4[%c0_3, %c0_4] : memref<8x32xf32, #tpu.memory_space<vmem>>, vector<8x32xf32>
    tpu.vector_store %arg4[%c0_3, %c0_4], %2 {strides = array<i32>} : memref<8x32xf32, #tpu.memory_space<vmem>>, vector<8x32xf32>,
    %c0_5 = arith.constant 0 : index
    %c0_6 = arith.constant 0 : index
    %4 = vector.load %arg3[%c0_5, %c0_6] : memref<32x4xf32, #tpu.memory_space<vmem>>, vector<32x4xf32>
    %cst_7 = arith.constant dense<0.000000e+00> : vector<8x4xf32>
    %5 = tpu.matmul %0, %4, %cst_7 {dimension_numbers = #tpu.dot_dimension_numbers<[1], [0], [0], [1], [0, 0, 1, 1], [], []>} : vector<8x32xf32>, vector<32x4xf32>, vector<8x4xf32> -> vector<8x4xf32>
    %c0_8 = arith.constant 0 : index
    %c0_9 = arith.constant 0 : index
    %6 = vector.load %arg5[%c0_8, %c0_9] : memref<8x4xf32, #tpu.memory_space<vmem>>, vector<8x4xf32>
    tpu.vector_store %arg5[%c0_8, %c0_9], %5 {strides = array<i32>} : memref<8x4xf32, #tpu.memory_space<vmem>>, vector<8x4xf32>,
    return
  }
  func.func @transform_0(%arg0: i32) -> (i32, i32) {
    %c0_i32 = arith.constant 0 : i32
    %c0_i32_0 = arith.constant 0 : i32
    return %arg0, %c0_i32 : i32, i32
  }
  func.func @transform_1(%arg0: i32) -> (i32, i32) {
    %c0_i32 = arith.constant 0 : i32
    %c0_i32_0 = arith.constant 0 : i32
    %c0_i32_1 = arith.constant 0 : i32
    return %c0_i32, %c0_i32_0 : i32, i32
  }
  func.func @transform_2(%arg0: i32) -> (i32, i32) {
    %c0_i32 = arith.constant 0 : i32
    %c0_i32_0 = arith.constant 0 : i32
    %c0_i32_1 = arith.constant 0 : i32
    return %c0_i32, %c0_i32_0 : i32, i32
  }
  func.func @transform_3(%arg0: i32) -> (i32, i32) {
    %c0_i32 = arith.constant 0 : i32
    %c0_i32_0 = arith.constant 0 : i32
    return %arg0, %c0_i32 : i32, i32
  }
  func.func @transform_4(%arg0: i32) -> (i32, i32) {
    %c0_i32 = arith.constant 0 : i32
    %c0_i32_0 = arith.constant 0 : i32
    return %arg0, %c0_i32 : i32, i32
  }
}

</mosaic_0001>

<llo_original>
// kernel: tpu_custom_call.1
$region0: #{tpu_custom_call.1}
  #allocation0 [shape = 'u32[]', space=smem, size = 0x4, offset = 0x4, fixed_abs, tag = 'smem constant byte address 0x4 - core index']
  #allocation1 [shape = 'u32[144,128]{1,0:T(1,128)}', space=vmem, size = 0x12000, scoped, tag = 'internal scratch']
  %s0 = inlined_call_operand.hbm [shape: f32[8,32], index: 0, kind: input, shape index: {}]
  %s1 = inlined_call_operand.vmem [shape: f32[32,32], index: 1, kind: input, shape index: {}]
  %s2 = inlined_call_operand.vmem [shape: f32[32,4], index: 2, kind: input, shape index: {}]
  %s3 = inlined_call_operand.hbm [shape: f32[8,32], index: 3, kind: output, shape index: {0}]
  %s4 = inlined_call_operand.vmem [shape: f32[8,4], index: 4, kind: output, shape index: {1}]
  %5 = xla_tuple %s3, %s4
  %s6 = sld [smem:[#allocation0]]
  $region34: #{tpu_custom_call.1} parent=0
    _
  %s8 = ssub.s32 1, %s6
  %s9 = scalar_select 0, %s8, %s6
  $region1: #{tpu_custom_call.1} parent=0
    #allocation2 [shape = 'u8[4096]{0}', space=vmem, size = 0x1000, scoped, tag = 'input window, operand 0, single buffered']
    #allocation3 [shape = 's32[1]{0}', space=sflag, size = 0x4, scoped, tag = 'scoped memory for tpu_custom_call.1']
    #allocation4 [shape = 's32[1]{0}', space=sflag, size = 0x4, scoped, tag = 'scoped memory for tpu_custom_call.1']
    #allocation5 [shape = 'u8[4096]{0}', space=vmem, size = 0x1000, scoped, tag = 'output window, operand 0, single buffered']
    %10 = vsyncpa [#allocation3], 0
    %11 = vsyncpa [#allocation4], 0
    // Predicated region
    $region2: #{tpu_custom_call.1} parent=1 // pred_check
      _
    $region3: #{tpu_custom_call.1} parent=1 // pred_check_branch
      %13 = sbr.rel (0) target = $region5
    $region4: #{tpu_custom_call.1} parent=1 // pred_region
      %s15 = ssub.s32 128, 128
      %16 = vsyncadd [#allocation3], %s15
      %s18 = sshll.u32 [#allocation2], 4
      %s19 = int_to_ptr.vmem [resolvable:$true] %s18
      %21 = dma.hbm_to_vmem [thread:$0]  %s0, 128, %s19, [#allocation3]
    $region5: #{tpu_custom_call.1} parent=1 // pred_fallthru
      _
    // Predicated region
    $region6: #{tpu_custom_call.1} parent=1 // pred_check
      _
    $region7: #{tpu_custom_call.1} parent=1 // pred_check_branch
      %23 = sbr.rel (0) target = $region9
    $region8: #{tpu_custom_call.1} parent=1 // pred_region
      _
    $region9: #{tpu_custom_call.1} parent=1 // pred_fallthru
      _
    // Predicated region
    $region10: #{tpu_custom_call.1} parent=1 // pred_check
      _
    $region11: #{tpu_custom_call.1} parent=1 // pred_check_branch
      %25 = sbr.rel (0) target = $region13
    $region12: #{tpu_custom_call.1} parent=1 // pred_region
      _
    $region13: #{tpu_custom_call.1} parent=1 // pred_fallthru
      _
    // Predicated region
    $region14: #{tpu_custom_call.1} parent=1 // pred_check
      _
    $region15: #{tpu_custom_call.1} parent=1 // pred_check_branch
      %27 = sbr.rel (0) target = $region17
    $region16: #{tpu_custom_call.1} parent=1 // pred_region
      %28 = dma.done [#allocation3], 128
    $region17: #{tpu_custom_call.1} parent=1 // pred_fallthru
      _
    %v29 = vld [vmem:[#allocation2] sm:$0xff]
    %v30 = vld [vmem:[%s1] sm:$0xff]
    %v31 = vld [vmem:[%s1 + $0x8] sm:$0xff]
    %v32 = vld [vmem:[%s1 + $0x10] sm:$0xff]
    %v33 = vld [vmem:[%s1 + $0x18] sm:$0xff]
    %vm34 = vcmask 261120
    %v36 = vsel %vm34, %v29, 0
    %38 = vmatprep.subr.mxu0 0.0
    %39 = vmatpush1.msra.mxu0 %v30
    %40 = vmatprep.subr.mxu0 0.0
    %41 = vmatpush1.msra.mxu0 %v31
    %42 = vmatprep.subr.mxu0 0.0
    %43 = vmatpush1.msra.mxu0 %v32
    %44 = vmatprep.subr.mxu0 0.0
    %45 = vmatpush1.msra.mxu0 %v33
    %46 = vmatprep.subr.mxu0 0.0
    %47 = vmatpush1.msra.mxu0 0.0
    %48 = vmatprep.subr.mxu0 0.0
    %49 = vmatpush1.msra.mxu0 0.0
    %50 = vmatprep.subr.mxu0 0.0
    %51 = vmatpush1.msra.mxu0 0.0
    %52 = vmatprep.subr.mxu0 0.0
    %53 = vmatpush1.msra.mxu0 0.0
    %54 = vmatprep.subr.mxu0 0.0
    %55 = vmatpush1.msra.mxu0 0.0
    %56 = vmatprep.subr.mxu0 0.0
    %57 = vmatpush1.msra.mxu0 0.0
    %58 = vmatprep.subr.mxu0 0.0
    %59 = vmatpush1.msra.mxu0 0.0
    %60 = vmatprep.subr.mxu0 0.0
    %61 = vmatpush1.msra.mxu0 0.0
    %62 = vmatprep.subr.mxu0 0.0
    %63 = vmatpush1.msra.mxu0 0.0
    %64 = vmatprep.subr.mxu0 0.0
    %65 = vmatpush1.msra.mxu0 0.0
    %66 = vmatprep.subr.mxu0 0.0
    %67 = vmatpush1.msra.mxu0 0.0
    %68 = vmatprep.subr.mxu0 0.0
    %69 = vmatpush1.msra.mxu0 0.0
    %70 = vmatprep.subr.mxu0 0.0
    %71 = vmatpush1.msra.mxu0 0.0
    %72 = vmatprep.subr.mxu0 0.0
    %73 = vmatpush1.msra.mxu0 0.0
    %74 = vmatprep.subr.mxu0 0.0
    %75 = vmatpush1.msra.mxu0 0.0
    %76 = vmatprep.subr.mxu0 0.0
    %77 = vmatpush1.msra.mxu0 0.0
    %78 = vmatprep.subr.mxu0 0.0
    %79 = vmatpush1.msra.mxu0 0.0
    %80 = vmatprep.subr.mxu0 0.0
    %81 = vmatpush1.msra.mxu0 0.0
    %82 = vmatprep.subr.mxu0 0.0
    %83 = vmatpush1.msra.mxu0 0.0
    %84 = vmatprep.subr.mxu0 0.0
    %85 = vmatpush1.msra.mxu0 0.0
    %86 = vmatprep.subr.mxu0 0.0
    %87 = vmatpush1.msra.mxu0 0.0
    %88 = vmatprep.subr.mxu0 0.0
    %89 = vmatpush1.msra.mxu0 0.0
    %90 = vmatprep.subr.mxu0 0.0
    %91 = vmatpush1.msra.mxu0 0.0
    %92 = vmatprep.subr.mxu0 0.0
    %93 = vmatpush1.msra.mxu0 0.0
    %94 = vmatprep.subr.mxu0 0.0
    %95 = vmatpush1.msra.mxu0 0.0
    %96 = vmatprep.subr.mxu0 0.0
    %97 = vmatpush1.msra.mxu0 0.0
    %98 = vmatprep.subr.mxu0 0.0
    %99 = vmatpush1.msra.mxu0 0.0
    %100 = vmatprep.subr.mxu0 0.0
    %101 = vmatpush1.msra.mxu0 0.0
    %102 = vmatprep.mubr.f32.mxu0 0.0
    %103 = vmatmul.mubr.f32.gmra.mrb[0].mxu0 %v36
    %v104 = vpop.f32.mrb[0].mxu0
    %v105 = vadd.f32 0.0, %v104
    %v106 = vpop.f32.mrb[0].mxu0
    %107 = vdwg.mxu0
    %108 = vst.msk [vmem:[#allocation5] sm:$0xff] %vm34, %v105
    %v109 = vld [vmem:[%s2] sm:$0xff]
    %v110 = vld [vmem:[%s2 + $0x8] sm:$0xff]
    %v111 = vld [vmem:[%s2 + $0x10] sm:$0xff]
    %v112 = vld [vmem:[%s2 + $0x18] sm:$0xff]
    %113 = vmatprep.subr.mxu0 0.0
    %114 = vmatpush1.msra.mxu0 %v109
    %115 = vmatprep.subr.mxu0 0.0
    %116 = vmatpush1.msra.mxu0 %v110
    %117 = vmatprep.subr.mxu0 0.0
    %118 = vmatpush1.msra.mxu0 %v111
    %119 = vmatprep.subr.mxu0 0.0
    %120 = vmatpush1.msra.mxu0 %v112
    %121 = vmatprep.subr.mxu0 0.0
    %122 = vmatpush1.msra.mxu0 0.0
    %123 = vmatprep.subr.mxu0 0.0
    %124 = vmatpush1.msra.mxu0 0.0
    %125 = vmatprep.subr.mxu0 0.0
    %126 = vmatpush1.msra.mxu0 0.0
    %127 = vmatprep.subr.mxu0 0.0
    %128 = vmatpush1.msra.mxu0 0.0
    %129 = vmatprep.subr.mxu0 0.0
    %130 = vmatpush1.msra.mxu0 0.0
    %131 = vmatprep.subr.mxu0 0.0
    %132 = vmatpush1.msra.mxu0 0.0
    %133 = vmatprep.subr.mxu0 0.0
    %134 = vmatpush1.msra.mxu0 0.0
    %135 = vmatprep.subr.mxu0 0.0
    %136 = vmatpush1.msra.mxu0 0.0
    %137 = vmatprep.subr.mxu0 0.0
    %138 = vmatpush1.msra.mxu0 0.0
    %139 = vmatprep.subr.mxu0 0.0
    %140 = vmatpush1.msra.mxu0 0.0
    %141 = vmatprep.subr.mxu0 0.0
    %142 = vmatpush1.msra.mxu0 0.0
    %143 = vmatprep.subr.mxu0 0.0
    %144 = vmatpush1.msra.mxu0 0.0
    %145 = vmatprep.subr.mxu0 0.0
    %146 = vmatpush1.msra.mxu0 0.0
    %147 = vmatprep.subr.mxu0 0.0
    %148 = vmatpush1.msra.mxu0 0.0
    %149 = vmatprep.subr.mxu0 0.0
    %150 = vmatpush1.msra.mxu0 0.0
    %151 = vmatprep.subr.mxu0 0.0
    %152 = vmatpush1.msra.mxu0 0.0
    %153 = vmatprep.subr.mxu0 0.0
    %154 = vmatpush1.msra.mxu0 0.0
    %155 = vmatprep.subr.mxu0 0.0
    %156 = vmatpush1.msra.mxu0 0.0
    %157 = vmatprep.subr.mxu0 0.0
    %158 = vmatpush1.msra.mxu0 0.0
    %159 = vmatprep.subr.mxu0 0.0
    %160 = vmatpush1.msra.mxu0 0.0
    %161 = vmatprep.subr.mxu0 0.0
    %162 = vmatpush1.msra.mxu0 0.0
    %163 = vmatprep.subr.mxu0 0.0
    %164 = vmatpush1.msra.mxu0 0.0
    %165 = vmatprep.subr.mxu0 0.0
    %166 = vmatpush1.msra.mxu0 0.0
    %167 = vmatprep.subr.mxu0 0.0
    %168 = vmatpush1.msra.mxu0 0.0
    %169 = vmatprep.subr.mxu0 0.0
    %170 = vmatpush1.msra.mxu0 0.0
    %171 = vmatprep.subr.mxu0 0.0
    %172 = vmatpush1.msra.mxu0 0.0
    %173 = vmatprep.subr.mxu0 0.0
    %174 = vmatpush1.msra.mxu0 0.0
    %175 = vmatprep.subr.mxu0 0.0
    %176 = vmatpush1.msra.mxu0 0.0
    %177 = vmatprep.mubr.f32.mxu0 0.0
    %178 = vmatmul.mubr.f32.gmra.mrb[0].mxu0 %v36
    %v179 = vpop.f32.mrb[0].mxu0
    %v180 = vadd.f32 0.0, %v179
    %v181 = vpop.f32.mrb[0].mxu0
    %182 = vdwg.mxu0
    %vm183 = vcmask 31744
    %184 = vst.msk [vmem:[%s4] sm:$0xff] %vm183, %v180
    // Predicated region
    $region18: #{tpu_custom_call.1} parent=1 // pred_check
      _
    $region19: #{tpu_custom_call.1} parent=1 // pred_check_branch
      %186 = sbr.rel (0) target = $region21
    $region20: #{tpu_custom_call.1} parent=1 // pred_region
      %s188 = ssub.s32 128, 128
      %189 = vsyncadd [#allocation4], %s188
      %s191 = sshll.u32 [#allocation5], 4
      %s192 = int_to_ptr.vmem [resolvable:$true] %s191
      %194 = dma.vmem_to_hbm [thread:$0]  %s192, 128, %s3, [#allocation4]
    $region21: #{tpu_custom_call.1} parent=1 // pred_fallthru
      _
    // Predicated region
    $region22: #{tpu_custom_call.1} parent=1 // pred_check
      _
    $region23: #{tpu_custom_call.1} parent=1 // pred_check_branch
      %196 = sbr.rel (0) target = $region25
    $region24: #{tpu_custom_call.1} parent=1 // pred_region
      _
    $region25: #{tpu_custom_call.1} parent=1 // pred_fallthru
      _
    // Predicated region
    $region26: #{tpu_custom_call.1} parent=1 // pred_check
      _
    $region27: #{tpu_custom_call.1} parent=1 // pred_check_branch
      %198 = sbr.rel (0) target = $region29
    $region28: #{tpu_custom_call.1} parent=1 // pred_region
      %199 = dma.done [#allocation4], 128
    $region29: #{tpu_custom_call.1} parent=1 // pred_fallthru
      _
    // Predicated region
    $region30: #{tpu_custom_call.1} parent=1 // pred_check
      _
    $region31: #{tpu_custom_call.1} parent=1 // pred_check_branch
      %201 = sbr.rel (0) target = $region33
    $region32: #{tpu_custom_call.1} parent=1 // pred_region
      _
    $region33: #{tpu_custom_call.1} parent=1 // pred_fallthru
      _
    %202 = vsyncpa [#allocation3], 1
    %203 = vsyncpa [#allocation4], 1

</llo_original>
